<compile_context>
chip_gen: v7x
topology: tpu7x:2x2x1
jax: 0.10.0
libtpu: 0.0.40
codegen_flags: <defaults>
</compile_context>

<pallas_src>
from functools import partial

import jax
import jax.numpy as jnp
from jax.experimental import pallas as pl
from jax.experimental.pallas import tpu as pltpu


def _densegrid_kernel(iota_ref, q_ref, grid_ref, out_ref, *, Nx, Ny, Nz, C):
    """One query tile.

    iota_ref : [S, 1]        f32, row r holds float(r), S = max(Nx, Ny, Nz)
    q_ref    : [3, TM]       f32 SoA grid-index coords (u->Nx, v->Ny, w->Nz)
    grid_ref : [C*Nx, Ny*Nz] f32, grid[c,i,j,k] at row c*Nx+i, col j*Nz+k
    out_ref  : [C, TM]       f32 transposed output (TM on the lane axis)
    """
    tm = q_ref.shape[1]

    u = q_ref[0:1, :]                       # [1, TM]
    v = q_ref[1:2, :]
    w = q_ref[2:3, :]
    gi = iota_ref[0:Nx, :]                  # [Nx, 1]
    gj = iota_ref[0:Ny, :]
    gk = iota_ref[0:Nz, :]

    # 1-D "hat" weights (zero outside [0, N-1] -> matches padding_mode='zeros').
    hat_u = jnp.maximum(0.0, 1.0 - jnp.abs(u - gi))     # [Nx, TM]
    hat_v = jnp.maximum(0.0, 1.0 - jnp.abs(v - gj))     # [Ny, TM]
    hat_w = jnp.maximum(0.0, 1.0 - jnp.abs(w - gk))     # [Nz, TM]

    # Separable (y, z) weight slab: [Ny*Nz, TM] (lane-dense, tile-aligned reshape).
    w_vw = (hat_v[:, None, :] * hat_w[None, :, :]).reshape(Ny * Nz, tm)

    # Stage 1 (MXU): contract y and z in one matmul -> [C*Nx, TM].
    b = jnp.dot(grid_ref[...], w_vw, preferred_element_type=jnp.float32)

    # Stage 2 (VPU): contract x per channel; output stays lane-dense [C, TM].
    rows = []
    for c in range(C):
        bc = b[c * Nx:(c + 1) * Nx, :]                   # [Nx, TM]
        rows.append(jnp.sum(bc * hat_u, axis=0, keepdims=True))
    out_ref[...] = jnp.concatenate(rows, axis=0)


def dense_grid_forward(query, grid, xyz_min, xyz_max, *, tm=512):
    """query: [..., 3] world coords; grid: [1, C, Nx, Ny, Nz]; returns [..., C]."""
    _, C, Nx, Ny, Nz = grid.shape
    lead_shape = query.shape[:-1]

    # --- glue (plain JAX): world coords -> continuous grid-index coords ---
    q = query.reshape(-1, 3).astype(jnp.float32)
    M = q.shape[0]
    t = (q - xyz_min) / (xyz_max - xyz_min)                     # [M, 3] in [0, 1]
    sizes = jnp.array([Nx - 1, Ny - 1, Nz - 1], jnp.float32)
    q_idx = (t * sizes).T                                       # [3, M]  (SoA)

    # Tile size: multiple of 128, capped at the padded query count.
    tm = max(128, (tm // 128) * 128)
    m_pad128 = pl.cdiv(M, 128) * 128
    tm_eff = min(tm, m_pad128)
    M_pad = pl.cdiv(M, tm_eff) * tm_eff
    q_soa = jnp.pad(q_idx, ((0, 0), (0, M_pad - M)))            # [3, M_pad]

    # Grid-invariant tables (hoisted out of the kernel).
    grid_mat = grid[0].reshape(C * Nx, Ny * Nz).astype(jnp.float32)
    S = max(Nx, Ny, Nz)
    iota_col = jnp.arange(S, dtype=jnp.float32)[:, None]        # [S, 1]

    out_t = pl.pallas_call(
        partial(_densegrid_kernel, Nx=Nx, Ny=Ny, Nz=Nz, C=C),
        out_shape=jax.ShapeDtypeStruct((C, M_pad), jnp.float32),
        grid=(M_pad // tm_eff,),
        in_specs=[
            pl.BlockSpec((S, 1), lambda m: (0, 0)),             # corner iota (invariant)
            pl.BlockSpec((3, tm_eff), lambda m: (0, m)),        # query tile (SoA)
            pl.BlockSpec((C * Nx, Ny * Nz), lambda m: (0, 0)),  # grid slab (invariant)
        ],
        out_specs=pl.BlockSpec((C, tm_eff), lambda m: (0, m)),  # lane-dense output
        compiler_params=pltpu.CompilerParams(
            dimension_semantics=("parallel",),
            vmem_limit_bytes=32 * 1024 * 1024,
        ),
    )(iota_col, q_soa, grid_mat)

    return out_t[:, :M].T.reshape(*lead_shape, C)


def dense_grid_ref(query, grid, xyz_min, xyz_max):
    """Pure-JAX gather-based reference (mirrors F.grid_sample semantics)."""
    _, C, Nx, Ny, Nz = grid.shape
    lead_shape = query.shape[:-1]
    q = query.reshape(-1, 3).astype(jnp.float32)
    t = (q - xyz_min) / (xyz_max - xyz_min)
    u = t[:, 0] * (Nx - 1)
    v = t[:, 1] * (Ny - 1)
    w = t[:, 2] * (Nz - 1)
    g = grid[0]                                              # [C, Nx, Ny, Nz]

    i0 = jnp.floor(u).astype(jnp.int32)
    j0 = jnp.floor(v).astype(jnp.int32)
    k0 = jnp.floor(w).astype(jnp.int32)
    fu, fv, fw = u - i0, v - j0, w - k0

    out = jnp.zeros((C, q.shape[0]), jnp.float32)
    for di in (0, 1):
        for dj in (0, 1):
            for dk in (0, 1):
                i, j, k = i0 + di, j0 + dj, k0 + dk
                wt = (jnp.where(di, fu, 1 - fu)
                      * jnp.where(dj, fv, 1 - fv)
                      * jnp.where(dk, fw, 1 - fw))
                valid = ((i >= 0) & (i < Nx) & (j >= 0) & (j < Ny)
                         & (k >= 0) & (k < Nz))
                ic = jnp.clip(i, 0, Nx - 1)
                jc = jnp.clip(j, 0, Ny - 1)
                kc = jnp.clip(k, 0, Nz - 1)
                vals = g[:, ic, jc, kc]                      # [C, M]
                out = out + vals * (wt * valid)[None, :]
    return out.T.reshape(*lead_shape, C)


if __name__ == "__main__":
    key = jax.random.PRNGKey(0)
    k_grid, k_query, k_query2 = jax.random.split(key, 3)

    # Module config (small): Nx=Ny=Nz=8, channel=4, domain [-1, 1]^3.
    Nx = Ny = Nz = 8
    channel = 4
    xyz_min = jnp.array([-1.0, -1.0, -1.0], jnp.float32)
    xyz_max = jnp.array([1.0, 1.0, 1.0], jnp.float32)

    # Random parameters (module inits to zeros; random is more telling).
    grid = jax.random.normal(k_grid, (1, channel, Nx, Ny, Nz), jnp.float32)

    # Query points [4, 256, 3]; slightly exceed the domain to exercise the
    # zero-padding path of grid_sample. 1024 queries -> 2 parallel grid steps.
    query = jax.random.uniform(k_query, (4, 256, 3), jnp.float32,
                               minval=-1.2, maxval=1.2)

    out = dense_grid_forward(query, grid, xyz_min, xyz_max)
    out = jax.block_until_ready(out)
    ref = dense_grid_ref(query, grid, xyz_min, xyz_max)
    assert out.shape == (4, 256, channel), out.shape
    assert jnp.allclose(out, ref, atol=1e-4, rtol=1e-4), \
        float(jnp.max(jnp.abs(out - ref)))

    # Second check: query count that is NOT a multiple of the tile size
    # (exercises the wrapper-side padding / trailing-tile path).
    query2 = jax.random.uniform(k_query2, (3, 50, 3), jnp.float32,
                                minval=-1.1, maxval=1.1)
    out2 = jax.block_until_ready(
        dense_grid_forward(query2, grid, xyz_min, xyz_max))
    ref2 = dense_grid_ref(query2, grid, xyz_min, xyz_max)
    assert out2.shape == (3, 50, channel), out2.shape
    assert jnp.allclose(out2, ref2, atol=1e-4, rtol=1e-4), \
        float(jnp.max(jnp.abs(out2 - ref2)))

    print("KERNEL_OK")
</pallas_src>

<mosaic_0001>
module attributes {stable_mosaic.version = 11 : i64} {
  func.func @_densegrid_kernel(%arg0: i32, %arg1: memref<8x1xf32, #tpu.memory_space<vmem>>, %arg2: memref<3x512xf32, #tpu.memory_space<vmem>>, %arg3: memref<32x64xf32, #tpu.memory_space<vmem>>, %arg4: memref<4x512xf32, #tpu.memory_space<vmem>>) attributes {dimension_semantics = [#tpu.dimension_semantics<parallel>], iteration_bounds = array<i64: 2>, scalar_prefetch = 0 : i64, scratch_operands = 0 : i64, tpu.core_type = #tpu.core_type<tc>, window_params = [{pipeline_mode = #tpu.pipeline_mode<synchronous>, transform_indices = @transform_0, window_bounds = array<i64: 8, 1>}, {transform_indices = @transform_1, window_bounds = array<i64: 3, 512>}, {pipeline_mode = #tpu.pipeline_mode<synchronous>, transform_indices = @transform_2, window_bounds = array<i64: 32, 64>}, {transform_indices = @transform_3, window_bounds = array<i64: 4, 512>}]} {
    %c0 = arith.constant 0 : index
    %c0_0 = arith.constant 0 : index
    %0 = vector.load %arg2[%c0, %c0_0] : memref<3x512xf32, #tpu.memory_space<vmem>>, vector<1x512xf32>
    %c1 = arith.constant 1 : index
    %c0_1 = arith.constant 0 : index
    %1 = vector.load %arg2[%c1, %c0_1] : memref<3x512xf32, #tpu.memory_space<vmem>>, vector<1x512xf32>
    %c2 = arith.constant 2 : index
    %c0_2 = arith.constant 0 : index
    %2 = vector.load %arg2[%c2, %c0_2] : memref<3x512xf32, #tpu.memory_space<vmem>>, vector<1x512xf32>
    %c0_3 = arith.constant 0 : index
    %c0_4 = arith.constant 0 : index
    %3 = vector.load %arg1[%c0_3, %c0_4] : memref<8x1xf32, #tpu.memory_space<vmem>>, vector<8x1xf32>
    %c0_5 = arith.constant 0 : index
    %c0_6 = arith.constant 0 : index
    %4 = vector.load %arg1[%c0_5, %c0_6] : memref<8x1xf32, #tpu.memory_space<vmem>>, vector<8x1xf32>
    %c0_7 = arith.constant 0 : index
    %c0_8 = arith.constant 0 : index
    %5 = vector.load %arg1[%c0_7, %c0_8] : memref<8x1xf32, #tpu.memory_space<vmem>>, vector<8x1xf32>
    %6 = vector.broadcast %0 : vector<1x512xf32> to vector<8x512xf32>
    %7 = vector.broadcast %3 : vector<8x1xf32> to vector<8x512xf32>
    %8 = arith.subf %6, %7 : vector<8x512xf32>
    %9 = math.absf %8 : vector<8x512xf32>
    %cst = arith.constant 1.000000e+00 : f32
    %10 = vector.broadcast %cst : f32 to vector<8x512xf32>
    %11 = arith.subf %10, %9 : vector<8x512xf32>
    %cst_9 = arith.constant 0.000000e+00 : f32
    %12 = vector.broadcast %cst_9 : f32 to vector<8x512xf32>
    %13 = arith.maximumf %12, %11 : vector<8x512xf32>
    %14 = vector.broadcast %1 : vector<1x512xf32> to vector<8x512xf32>
    %15 = vector.broadcast %4 : vector<8x1xf32> to vector<8x512xf32>
    %16 = arith.subf %14, %15 : vector<8x512xf32>
    %17 = math.absf %16 : vector<8x512xf32>
    %cst_10 = arith.constant 1.000000e+00 : f32
    %18 = vector.broadcast %cst_10 : f32 to vector<8x512xf32>
    %19 = arith.subf %18, %17 : vector<8x512xf32>
    %cst_11 = arith.constant 0.000000e+00 : f32
    %20 = vector.broadcast %cst_11 : f32 to vector<8x512xf32>
    %21 = arith.maximumf %20, %19 : vector<8x512xf32>
    %22 = vector.broadcast %2 : vector<1x512xf32> to vector<8x512xf32>
    %23 = vector.broadcast %5 : vector<8x1xf32> to vector<8x512xf32>
    %24 = arith.subf %22, %23 : vector<8x512xf32>
    %25 = math.absf %24 : vector<8x512xf32>
    %cst_12 = arith.constant 1.000000e+00 : f32
    %26 = vector.broadcast %cst_12 : f32 to vector<8x512xf32>
    %27 = arith.subf %26, %25 : vector<8x512xf32>
    %cst_13 = arith.constant 0.000000e+00 : f32
    %28 = vector.broadcast %cst_13 : f32 to vector<8x512xf32>
    %29 = arith.maximumf %28, %27 : vector<8x512xf32>
    %30 = vector.shape_cast %21 : vector<8x512xf32> to vector<8x1x512xf32>
    %31 = vector.shape_cast %29 : vector<8x512xf32> to vector<1x8x512xf32>
    %32 = vector.broadcast %30 : vector<8x1x512xf32> to vector<8x8x512xf32>
    %33 = vector.broadcast %31 : vector<1x8x512xf32> to vector<8x8x512xf32>
    %34 = arith.mulf %32, %33 : vector<8x8x512xf32>
    %35 = vector.shape_cast %34 : vector<8x8x512xf32> to vector<64x512xf32>
    %c0_14 = arith.constant 0 : index
    %c0_15 = arith.constant 0 : index
    %36 = vector.load %arg3[%c0_14, %c0_15] : memref<32x64xf32, #tpu.memory_space<vmem>>, vector<32x64xf32>
    %cst_16 = arith.constant dense<0.000000e+00> : vector<32x512xf32>
    %37 = tpu.matmul %36, %35, %cst_16 {dimension_numbers = #tpu.dot_dimension_numbers<[1], [0], [0], [1], [0, 0, 1, 1], [], []>} : vector<32x64xf32>, vector<64x512xf32>, vector<32x512xf32> -> vector<32x512xf32>
    %38 = vector.extract_strided_slice %37 {offsets = [0, 0], sizes = [8, 512], strides = [1, 1]} : vector<32x512xf32> to vector<8x512xf32>
    %39 = arith.mulf %38, %13 : vector<8x512xf32>
    %cst_17 = arith.constant dense<0.000000e+00> : vector<512xf32>
    %40 = vector.multi_reduction <add>, %39, %cst_17 [0] : vector<8x512xf32> to vector<512xf32>
    %41 = vector.shape_cast %40 : vector<512xf32> to vector<1x512xf32>
    %42 = vector.extract_strided_slice %37 {offsets = [8, 0], sizes = [8, 512], strides = [1, 1]} : vector<32x512xf32> to vector<8x512xf32>
    %43 = arith.mulf %42, %13 : vector<8x512xf32>
    %cst_18 = arith.constant dense<0.000000e+00> : vector<512xf32>
    %44 = vector.multi_reduction <add>, %43, %cst_18 [0] : vector<8x512xf32> to vector<512xf32>
    %45 = vector.shape_cast %44 : vector<512xf32> to vector<1x512xf32>
    %46 = vector.extract_strided_slice %37 {offsets = [16, 0], sizes = [8, 512], strides = [1, 1]} : vector<32x512xf32> to vector<8x512xf32>
    %47 = arith.mulf %46, %13 : vector<8x512xf32>
    %cst_19 = arith.constant dense<0.000000e+00> : vector<512xf32>
    %48 = vector.multi_reduction <add>, %47, %cst_19 [0] : vector<8x512xf32> to vector<512xf32>
    %49 = vector.shape_cast %48 : vector<512xf32> to vector<1x512xf32>
    %50 = vector.extract_strided_slice %37 {offsets = [24, 0], sizes = [8, 512], strides = [1, 1]} : vector<32x512xf32> to vector<8x512xf32>
    %51 = arith.mulf %50, %13 : vector<8x512xf32>
    %cst_20 = arith.constant dense<0.000000e+00> : vector<512xf32>
    %52 = vector.multi_reduction <add>, %51, %cst_20 [0] : vector<8x512xf32> to vector<512xf32>
    %53 = vector.shape_cast %52 : vector<512xf32> to vector<1x512xf32>
    %54 = tpu.concatenate %41, %45, %49, %53 in 0 : vector<1x512xf32>, vector<1x512xf32>, vector<1x512xf32>, vector<1x512xf32> -> vector<4x512xf32>
    %c0_21 = arith.constant 0 : index
    %c0_22 = arith.constant 0 : index
    %55 = vector.load %arg4[%c0_21, %c0_22] : memref<4x512xf32, #tpu.memory_space<vmem>>, vector<4x512xf32>
    tpu.vector_store %arg4[%c0_21, %c0_22], %54 {strides = array<i32>} : memref<4x512xf32, #tpu.memory_space<vmem>>, vector<4x512xf32>,
    return
  }
  func.func @transform_0(%arg0: i32) -> (i32, i32) {
    %c0_i32 = arith.constant 0 : i32
    %c0_i32_0 = arith.constant 0 : i32
    %c0_i32_1 = arith.constant 0 : i32
    return %c0_i32, %c0_i32_0 : i32, i32
  }
  func.func @transform_1(%arg0: i32) -> (i32, i32) {
    %c0_i32 = arith.constant 0 : i32
    %c0_i32_0 = arith.constant 0 : i32
    return %c0_i32, %arg0 : i32, i32
  }
  func.func @transform_2(%arg0: i32) -> (i32, i32) {
    %c0_i32 = arith.constant 0 : i32
    %c0_i32_0 = arith.constant 0 : i32
    %c0_i32_1 = arith.constant 0 : i32
    return %c0_i32, %c0_i32_0 : i32, i32
  }
  func.func @transform_3(%arg0: i32) -> (i32, i32) {
    %c0_i32 = arith.constant 0 : i32
    %c0_i32_0 = arith.constant 0 : i32
    return %c0_i32, %arg0 : i32, i32
  }
}

</mosaic_0001>

<llo_original>
// kernel: tpu_custom_call.1
$region0: #{tpu_custom_call.1}
  #allocation0 [shape = 'u32[]', space=smem, size = 0x4, offset = 0x4, fixed_abs, tag = 'smem constant byte address 0x4 - core index']
  #allocation1 [shape = 'u32[144,128]{1,0:T(1,128)}', space=vmem, size = 0x12000, scoped, tag = 'internal scratch']
  %s0 = inlined_call_operand.vmem [shape: f32[8,1], index: 0, kind: input, shape index: {}]
  %s1 = inlined_call_operand.hbm [shape: f32[3,1024], index: 1, kind: input, shape index: {}]
  %s2 = inlined_call_operand.hbm [shape: f32[32,64], index: 2, kind: input, shape index: {}]
  %s3 = inlined_call_operand.hbm [shape: f32[4,1024], index: 3, kind: output, shape index: {}]
  %s4 = sld [smem:[#allocation0]]
  $region53: #{tpu_custom_call.1} parent=0
    _
  %s6 = ssub.s32 1, %s4
  %s7 = scalar_select 0, %s6, %s4
  $region1: #{tpu_custom_call.1} parent=0
    #allocation2 [shape = 'u8[16384]{0}', space=vmem, size = 0x4000, scoped, tag = 'input window, operand 1']
    #allocation3 [shape = 's32[2]{0}', space=sflag, size = 0x8, scoped, tag = 'scoped memory for tpu_custom_call.1']
    #allocation4 [shape = 's32[2]{0}', space=sflag, size = 0x8, scoped, tag = 'scoped memory for tpu_custom_call.1']
    #allocation5 [shape = 'u8[16384]{0}', space=vmem, size = 0x4000, scoped, tag = 'input window, operand 2, single buffered']
    #allocation6 [shape = 's32[1]{0}', space=sflag, size = 0x4, scoped, tag = 'scoped memory for tpu_custom_call.1']
    #allocation7 [shape = 'u8[16384]{0}', space=vmem, size = 0x4000, scoped, tag = 'output window, operand 0']
    %8 = vsyncpa [#allocation3], 0
    %s9 = scalar_lea.sflag [#allocation3], 1
    %10 = vsyncpa %s9, 0
    %11 = vsyncpa [#allocation6], 0
    %12 = vsyncpa [#allocation4], 0
    %s13 = scalar_lea.sflag [#allocation4], 1
    %14 = vsyncpa %s13, 0
    loop: start=0, step=1, limit=4
    $region2: #{tpu_custom_call.1} parent=1 // loop_pre_header
      _
    $region3: #{tpu_custom_call.1} parent=1 // loop_header
      %s16 = sphi 0, %s20
      %p17 = scmp.ge.s32.totalorder %s16, 4
      %s24 = sphi 0, %s24
      %s26 = sphi 0, %s24
      %s27 = sphi 0, %s26
      %s41 = sphi 0, %s27
      %s47 = sphi 0, %s49
      %s50 = sphi 0, %s47
      %s51 = sphi 0, %s50
      %s67 = sphi 0, %s51
      %s71 = sphi 0, %s71
      %s73 = sphi 0, %s71
      %s74 = sphi 0, %s73
      %s88 = sphi 0, %s74
      %s94 = sphi 0, %s96
      %s97 = sphi 0, %s94
      %s98 = sphi 0, %s97
      %s114 = sphi 0, %s98
    $region4: #{tpu_custom_call.1} parent=1 // loop_header_branch
      %19 = sbr.rel (%p17) target = $region8
    $region5: #{tpu_custom_call.1} parent=1 // loop_body
      %s21 = ssub.s32 %s16, 1
      %s22 = ssub.s32 %s16, 2
      %s23 = sadd.s32 %s16, 1
      %s25 = sadd.s32 %s24, 1
      %p28 = scmp.eq.s32.totalorder %s16, 1
      %p29 = scmp.ne.s32.totalorder %s24, %s26
      %p30 = scmp.eq.s32.totalorder %s16, 0
      %p31 = por %p29, %p30
      %p32 = scmp.ne.s32.totalorder %s24, %s26
      %p33 = scmp.eq.s32.totalorder %s21, 1
      %p34 = por %p32, %p33
      %p35 = scmp.ne.s32.totalorder %s26, %s27
      %p36 = scmp.eq.s32.totalorder %s21, 0
      %p37 = por %p35, %p36
      %p38 = scmp.ne.s32.totalorder %s26, %s27
      %p39 = scmp.eq.s32.totalorder %s22, 1
      %p40 = por %p38, %p39
      %p42 = scmp.ne.s32.totalorder %s27, %s41
      %p43 = scmp.eq.s32.totalorder %s22, 0
      %p44 = por %p42, %p43
      %s45 = ssub.s32 %s16, %s23
      %p46 = scmp.eq.s32.totalorder %s45, 0
      %s48 = sadd.s32 %s47, 1
      %s49 = scalar_select %p46, %s47, %s48
      %p52 = pneg %p46
      %p53 = scmp.eq.s32.totalorder %s16, 1
      %p54 = por %p52, %p53
      %p55 = scmp.ne.s32.totalorder %s47, %s50
      %p56 = scmp.eq.s32.totalorder %s16, 0
      %p57 = por %p55, %p56
      %p58 = scmp.ne.s32.totalorder %s47, %s50
      %p59 = scmp.eq.s32.totalorder %s21, 1
      %p60 = por %p58, %p59
      %p61 = scmp.ne.s32.totalorder %s50, %s51
      %p62 = scmp.eq.s32.totalorder %s21, 0
      %p63 = por %p61, %p62
      %p64 = scmp.ne.s32.totalorder %s50, %s51
      %p65 = scmp.eq.s32.totalorder %s22, 1
      %p66 = por %p64, %p65
      %p68 = scmp.ne.s32.totalorder %s51, %s67
      %p69 = scmp.eq.s32.totalorder %s22, 0
      %p70 = por %p68, %p69
      %s72 = sadd.s32 %s71, 1
      %p75 = scmp.eq.s32.totalorder %s16, 1
      %p76 = scmp.ne.s32.totalorder %s71, %s73
      %p77 = scmp.eq.s32.totalorder %s16, 0
      %p78 = por %p76, %p77
      %p79 = scmp.ne.s32.totalorder %s71, %s73
      %p80 = scmp.eq.s32.totalorder %s21, 1
      %p81 = por %p79, %p80
      %p82 = scmp.ne.s32.totalorder %s73, %s74
      %p83 = scmp.eq.s32.totalorder %s21, 0
      %p84 = por %p82, %p83
      %p85 = scmp.ne.s32.totalorder %s73, %s74
      %p86 = scmp.eq.s32.totalorder %s22, 1
      %p87 = por %p85, %p86
      %p89 = scmp.ne.s32.totalorder %s74, %s88
      %p90 = scmp.eq.s32.totalorder %s22, 0
      %p91 = por %p89, %p90
      %s92 = ssub.s32 %s16, %s23
      %p93 = scmp.eq.s32.totalorder %s92, 0
      %s95 = sadd.s32 %s94, 1
      %s96 = scalar_select %p93, %s94, %s95
      %p99 = pneg %p93
      %p100 = scmp.eq.s32.totalorder %s16, 1
      %p101 = por %p99, %p100
      %p102 = scmp.ne.s32.totalorder %s94, %s97
      %p103 = scmp.eq.s32.totalorder %s16, 0
      %p104 = por %p102, %p103
      %p105 = scmp.ne.s32.totalorder %s94, %s97
      %p106 = scmp.eq.s32.totalorder %s21, 1
      %p107 = por %p105, %p106
      %p108 = scmp.ne.s32.totalorder %s97, %s98
      %p109 = scmp.eq.s32.totalorder %s21, 0
      %p110 = por %p108, %p109
      %p111 = scmp.ne.s32.totalorder %s97, %s98
      %p112 = scmp.eq.s32.totalorder %s22, 1
      %p113 = por %p111, %p112
      %p115 = scmp.ne.s32.totalorder %s98, %s114
      %p116 = scmp.eq.s32.totalorder %s22, 0
      %p117 = por %p115, %p116
      %p118 = scmp.le.s32.totalorder 1, %s16
      %p119 = scmp.lt.s32.totalorder %s16, 3
      %p120 = pnand %p118, %p119
      %p121 = pneg %p120
      // Predicated region
      $region9: #{tpu_custom_call.1} parent=5 // pred_check
        _
      $region10: #{tpu_custom_call.1} parent=5 // pred_check_branch
        %123 = sbr.rel (%p120) target = $region12
      $region11: #{tpu_custom_call.1} parent=5 // pred_region
        %s124 = ssub.s32 %s16, 1
        // Predicated region
        $region13: #{tpu_custom_call.1} parent=11 // pred_check
          %p125 = pneg %p37
        $region14: #{tpu_custom_call.1} parent=11 // pred_check_branch
          %127 = sbr.rel (%p125) target = $region16
        $region15: #{tpu_custom_call.1} parent=11 // pred_region
          _
        $region16: #{tpu_custom_call.1} parent=11 // pred_fallthru
          _
        // Predicated region
        $region17: #{tpu_custom_call.1} parent=11 // pred_check
          %p128 = pneg %p84
        $region18: #{tpu_custom_call.1} parent=11 // pred_check_branch
          %130 = sbr.rel (%p128) target = $region20
        $region19: #{tpu_custom_call.1} parent=11 // pred_region
          %s132 = ssub.s32 512, 512
          %133 = vsyncadd [#allocation6], %s132
          %s134 = sshll.u32 [#allocation5], 4
          %s135 = int_to_ptr.vmem [resolvable:$true] %s134
          %140 = dma.hbm_to_vmem [thread:$0]  %s2, 512, %s135, [#allocation6], 128, 128, 8
        $region20: #{tpu_custom_call.1} parent=11 // pred_fallthru
          _
      $region12: #{tpu_custom_call.1} parent=5 // pred_fallthru
        _
      %p141 = scmp.lt.s32.totalorder %s16, 2
      // Predicated region
      $region21: #{tpu_custom_call.1} parent=5 // pred_check
        %p142 = pneg %p141
      $region22: #{tpu_custom_call.1} parent=5 // pred_check_branch
        %144 = sbr.rel (%p142) target = $region24
      $region23: #{tpu_custom_call.1} parent=5 // pred_region
        // Predicated region
        $region25: #{tpu_custom_call.1} parent=23 // pred_check
          %p145 = pneg %p57
        $region26: #{tpu_custom_call.1} parent=23 // pred_check_branch
          %147 = sbr.rel (%p145) target = $region28
        $region27: #{tpu_custom_call.1} parent=23 // pred_region
          %s148 = sand.u32 %s47, 1
          %s149 = scalar_lea.sflag [#allocation3], %s148
          %s150 = sand.u32 %s47, 1
          %s151 = smul.addr %s150, 16
          %s152 = scalar_lea.vmem [#allocation2], %s151
          %s153 = smul.u32 4, %s16
          %s155 = ssub.s32 256, 256
          %156 = vsyncadd %s149, %s155
          %s157 = smul.addr %s153, 64
          %s158 = scalar_lea.hbm %s1, %s157
          %s160 = sshll.u32 %s152, 4
          %s161 = int_to_ptr.vmem [resolvable:$true] %s160
          %163 = dma.hbm_to_vmem [thread:$0]  %s158, 256, %s161, %s149
        $region28: #{tpu_custom_call.1} parent=23 // pred_fallthru
          _
      $region24: #{tpu_custom_call.1} parent=5 // pred_fallthru
        _
      %p164 = scmp.le.s32.totalorder 1, %s16
      %p165 = scmp.lt.s32.totalorder %s16, 3
      %p166 = pnand %p164, %p165
      %p167 = pneg %p166
      // Predicated region
      $region29: #{tpu_custom_call.1} parent=5 // pred_check
        _
      $region30: #{tpu_custom_call.1} parent=5 // pred_check_branch
        %169 = sbr.rel (%p166) target = $region32
      $region31: #{tpu_custom_call.1} parent=5 // pred_region
        %s170 = ssub.s32 %s16, 1
        %s171 = sand.u32 %s50, 1
        %s172 = scalar_lea.sflag [#allocation3], %s171
        %s173 = sand.u32 %s50, 1
        %s174 = smul.addr %s173, 16
        %s175 = scalar_lea.vmem [#allocation2], %s174
        // Predicated region
        $region33: #{tpu_custom_call.1} parent=31 // pred_check
          %p176 = pneg %p63
        $region34: #{tpu_custom_call.1} parent=31 // pred_check_branch
          %178 = sbr.rel (%p176) target = $region36
        $region35: #{tpu_custom_call.1} parent=31 // pred_region
          %179 = dma.done %s172, 256
        $region36: #{tpu_custom_call.1} parent=31 // pred_fallthru
          _
        // Predicated region
        $region37: #{tpu_custom_call.1} parent=31 // pred_check
          %p180 = pneg %p84
        $region38: #{tpu_custom_call.1} parent=31 // pred_check_branch
          %182 = sbr.rel (%p180) target = $region40
        $region39: #{tpu_custom_call.1} parent=31 // pred_region
          %183 = dma.done [#allocation6], 512
        $region40: #{tpu_custom_call.1} parent=31 // pred_fallthru
          _
        %p184 = pneg %p37
        %p185 = pneg %p34
        %s186 = sand.u32 %s50, 1
        %s187 = scalar_lea.sflag [#allocation3], %s186
        %s188 = sand.u32 %s50, 1
        %s189 = smul.addr %s188, 16
        %s190 = scalar_lea.vmem [#allocation2], %s189
        %p191 = pneg %p63
        %p192 = pneg %p60
        %p193 = pneg %p84
        %p194 = pneg %p81
        %p195 = pneg %p110
        %p196 = pneg %p107
        %s197 = sand.u32 %s97, 1
        %s198 = scalar_lea.sflag [#allocation4], %s197
        %s199 = sand.u32 %s97, 1
        %s200 = smul.addr %s199, 16
        %s201 = scalar_lea.vmem [#allocation7], %s200
        %s202 = smul.u32 4, %s21
        %s203 = smul.u32 4, %s21
        %v204 = vld [vmem:[%s175] ss:$4 sm:$0xf]
        %s205 = scalar_lea.vmem %s175, 1 [#allocation2]
        %v206 = vld [vmem:[%s205] ss:$4 sm:$0xf]
        %s207 = scalar_lea.vmem %s175, 2 [#allocation2]
        %v208 = vld [vmem:[%s207] ss:$4 sm:$0xf]
        %v209 = vld [vmem:[%s0] sm:$0xff]
        %v211 = vlaneseq
        %v212 = vshrl.u32 %v211, 7
        %v213 = vsub.s32 0, %v212
        %v214 = vrot.slane %v204, %v213
        %v215 = vlaneseq
        %v216 = vshrl.u32 %v215, 7
        %v217 = vsub.s32 1, %v216
        %v218 = vrot.slane %v204, %v217
        %v219 = vlaneseq
        %v220 = vshrl.u32 %v219, 7
        %v221 = vsub.s32 2, %v220
        %v222 = vrot.slane %v204, %v221
        %v223 = vlaneseq
        %v224 = vshrl.u32 %v223, 7
        %v225 = vsub.s32 3, %v224
        %v226 = vrot.slane %v204, %v225
        %232 = vset.pattern.permute.xlu0 0
        %233 = vperm.xlu0 %232, %v209
        %v234 = vpop.permute.xlu0 %233
        %v236 = vsub.f32 %v214, %v234
        %v237 = vsub.f32 %v218, %v234
        %v238 = vsub.f32 %v222, %v234
        %v239 = vsub.f32 %v226, %v234
        %v240 = vand.u32 2147483647, %v236
        %v241 = vand.u32 2147483647, %v237
        %v242 = vand.u32 2147483647, %v238
        %v243 = vand.u32 2147483647, %v239
        %v244 = vsub.f32 1.0, %v240
        %v245 = vsub.f32 1.0, %v241
        %v246 = vsub.f32 1.0, %v242
        %v247 = vsub.f32 1.0, %v243
        %v248 = vmax.f32 %v244, 0.0
        %v249 = vmax.f32 %v245, 0.0
        %v250 = vmax.f32 %v246, 0.0
        %v251 = vmax.f32 %v247, 0.0
        %v253 = vlaneseq
        %v254 = vshrl.u32 %v253, 7
        %v255 = vsub.s32 0, %v254
        %v256 = vrot.slane %v206, %v255
        %v257 = vlaneseq
        %v258 = vshrl.u32 %v257, 7
        %v259 = vsub.s32 1, %v258
        %v260 = vrot.slane %v206, %v259
        %v261 = vlaneseq
        %v262 = vshrl.u32 %v261, 7
        %v263 = vsub.s32 2, %v262
        %v264 = vrot.slane %v206, %v263
        %v265 = vlaneseq
        %v266 = vshrl.u32 %v265, 7
        %v267 = vsub.s32 3, %v266
        %v268 = vrot.slane %v206, %v267
        %v273 = vsub.f32 %v256, %v234
        %v274 = vsub.f32 %v260, %v234
        %v275 = vsub.f32 %v264, %v234
        %v276 = vsub.f32 %v268, %v234
        %v277 = vand.u32 2147483647, %v273
        %v278 = vand.u32 2147483647, %v274
        %v279 = vand.u32 2147483647, %v275
        %v280 = vand.u32 2147483647, %v276
        %v281 = vsub.f32 1.0, %v277
        %v282 = vsub.f32 1.0, %v278
        %v283 = vsub.f32 1.0, %v279
        %v284 = vsub.f32 1.0, %v280
        %v285 = vmax.f32 %v281, 0.0
        %v286 = vmax.f32 %v282, 0.0
        %v287 = vmax.f32 %v283, 0.0
        %v288 = vmax.f32 %v284, 0.0
        %v290 = vlaneseq
        %v291 = vshrl.u32 %v290, 7
        %v292 = vsub.s32 0, %v291
        %v293 = vrot.slane %v208, %v292
        %v294 = vlaneseq
        %v295 = vshrl.u32 %v294, 7
        %v296 = vsub.s32 1, %v295
        %v297 = vrot.slane %v208, %v296
        %v298 = vlaneseq
        %v299 = vshrl.u32 %v298, 7
        %v300 = vsub.s32 2, %v299
        %v301 = vrot.slane %v208, %v300
        %v302 = vlaneseq
        %v303 = vshrl.u32 %v302, 7
        %v304 = vsub.s32 3, %v303
        %v305 = vrot.slane %v208, %v304
        %v310 = vsub.f32 %v293, %v234
        %v311 = vsub.f32 %v297, %v234
        %v312 = vsub.f32 %v301, %v234
        %v313 = vsub.f32 %v305, %v234
        %v314 = vand.u32 2147483647, %v310
        %v315 = vand.u32 2147483647, %v311
        %v316 = vand.u32 2147483647, %v312
        %v317 = vand.u32 2147483647, %v313
        %v318 = vsub.f32 1.0, %v314
        %v319 = vsub.f32 1.0, %v315
        %v320 = vsub.f32 1.0, %v316
        %v321 = vsub.f32 1.0, %v317
        %v322 = vmax.f32 %v318, 0.0
        %v323 = vmax.f32 %v319, 0.0
        %v324 = vmax.f32 %v320, 0.0
        %v325 = vmax.f32 %v321, 0.0
        %v330 = vcombine.low %v285, %v286
        %v331 = vcombine.high %v285, %v286
        %v332 = vcombine.low %v287, %v288
        %v333 = vcombine.high %v287, %v288
        %v335 = vunpack.c.l.s4 1966171168
        %v336 = vunpack.c.0.s8 %v335
        %v337 = vlaneseq
        %v338 = vshrl.u32 %v337, 7
        %v339 = vsub.s32 %v336, %v338
        %v340 = vrot.slane %v330, %v339
        %v342 = vunpack.c.l.s4 1966171168
        %v343 = vunpack.c.0.s8 %v342
        %v344 = vlaneseq
        %v345 = vshrl.u32 %v344, 7
        %v346 = vsub.s32 %v343, %v345
        %v347 = vrot.slane %v331, %v346
        %v349 = vunpack.c.l.s4 1966171168
        %v350 = vunpack.c.0.s8 %v349
        %v351 = vlaneseq
        %v352 = vshrl.u32 %v351, 7
        %v353 = vsub.s32 %v350, %v352
        %v354 = vrot.slane %v332, %v353
        %v356 = vunpack.c.l.s4 1966171168
        %v357 = vunpack.c.0.s8 %v356
        %v358 = vlaneseq
        %v359 = vshrl.u32 %v358, 7
        %v360 = vsub.s32 %v357, %v359
        %v361 = vrot.slane %v333, %v360
        %v362 = vcombine.low %v340, %v354
        %v363 = vcombine.high %v340, %v354
        %v364 = vcombine.low %v347, %v361
        %v365 = vcombine.high %v347, %v361
        %v367 = vunpack.c.l.s4 1966171168
        %v368 = vunpack.c.0.s8 %v367
        %v369 = vlaneseq
        %v370 = vshrl.u32 %v369, 7
        %v371 = vsub.s32 %v368, %v370
        %v372 = vrot.slane %v362, %v371
        %v374 = vunpack.c.l.s4 1966171168
        %v375 = vunpack.c.0.s8 %v374
        %v376 = vlaneseq
        %v377 = vshrl.u32 %v376, 7
        %v378 = vsub.s32 %v375, %v377
        %v379 = vrot.slane %v364, %v378
        %v381 = vunpack.c.l.s4 1966171168
        %v382 = vunpack.c.0.s8 %v381
        %v383 = vlaneseq
        %v384 = vshrl.u32 %v383, 7
        %v385 = vsub.s32 %v382, %v384
        %v386 = vrot.slane %v363, %v385
        %v388 = vunpack.c.l.s4 1966171168
        %v389 = vunpack.c.0.s8 %v388
        %v390 = vlaneseq
        %v391 = vshrl.u32 %v390, 7
        %v392 = vsub.s32 %v389, %v391
        %v393 = vrot.slane %v365, %v392
        %v394 = vcombine.high %v372, %v372
        %v395 = vcombine.high %v379, %v379
        %v396 = vcombine.high %v386, %v386
        %v397 = vcombine.high %v393, %v393
        %v398 = vlaneseq
        %v399 = vshrl.u32 %v398, 7
        %v400 = vsub.s32 0, %v399
        %v401 = vrot.slane %v372, %v400
        %v402 = vlaneseq
        %v403 = vshrl.u32 %v402, 7
        %v404 = vsub.s32 1, %v403
        %v405 = vrot.slane %v372, %v404
        %v406 = vlaneseq
        %v407 = vshrl.u32 %v406, 7
        %v408 = vsub.s32 2, %v407
        %v409 = vrot.slane %v372, %v408
        %v410 = vlaneseq
        %v411 = vshrl.u32 %v410, 7
        %v412 = vsub.s32 3, %v411
        %v413 = vrot.slane %v372, %v412
        %v414 = vlaneseq
        %v415 = vshrl.u32 %v414, 7
        %v416 = vsub.s32 0, %v415
        %v417 = vrot.slane %v386, %v416
        %v418 = vlaneseq
        %v419 = vshrl.u32 %v418, 7
        %v420 = vsub.s32 1, %v419
        %v421 = vrot.slane %v386, %v420
        %v422 = vlaneseq
        %v423 = vshrl.u32 %v422, 7
        %v424 = vsub.s32 2, %v423
        %v425 = vrot.slane %v386, %v424
        %v426 = vlaneseq
        %v427 = vshrl.u32 %v426, 7
        %v428 = vsub.s32 3, %v427
        %v429 = vrot.slane %v386, %v428
        %v430 = vlaneseq
        %v431 = vshrl.u32 %v430, 7
        %v432 = vsub.s32 0, %v431
        %v433 = vrot.slane %v394, %v432
        %v434 = vlaneseq
        %v435 = vshrl.u32 %v434, 7
        %v436 = vsub.s32 1, %v435
        %v437 = vrot.slane %v394, %v436
        %v438 = vlaneseq
        %v439 = vshrl.u32 %v438, 7
        %v440 = vsub.s32 2, %v439
        %v441 = vrot.slane %v394, %v440
        %v442 = vlaneseq
        %v443 = vshrl.u32 %v442, 7
        %v444 = vsub.s32 3, %v443
        %v445 = vrot.slane %v394, %v444
        %v446 = vlaneseq
        %v447 = vshrl.u32 %v446, 7
        %v448 = vsub.s32 0, %v447
        %v449 = vrot.slane %v396, %v448
        %v450 = vlaneseq
        %v451 = vshrl.u32 %v450, 7
        %v452 = vsub.s32 1, %v451
        %v453 = vrot.slane %v396, %v452
        %v454 = vlaneseq
        %v455 = vshrl.u32 %v454, 7
        %v456 = vsub.s32 2, %v455
        %v457 = vrot.slane %v396, %v456
        %v458 = vlaneseq
        %v459 = vshrl.u32 %v458, 7
        %v460 = vsub.s32 3, %v459
        %v461 = vrot.slane %v396, %v460
        %v462 = vlaneseq
        %v463 = vshrl.u32 %v462, 7
        %v464 = vsub.s32 0, %v463
        %v465 = vrot.slane %v379, %v464
        %v466 = vlaneseq
        %v467 = vshrl.u32 %v466, 7
        %v468 = vsub.s32 1, %v467
        %v469 = vrot.slane %v379, %v468
        %v470 = vlaneseq
        %v471 = vshrl.u32 %v470, 7
        %v472 = vsub.s32 2, %v471
        %v473 = vrot.slane %v379, %v472
        %v474 = vlaneseq
        %v475 = vshrl.u32 %v474, 7
        %v476 = vsub.s32 3, %v475
        %v477 = vrot.slane %v379, %v476
        %v478 = vlaneseq
        %v479 = vshrl.u32 %v478, 7
        %v480 = vsub.s32 0, %v479
        %v481 = vrot.slane %v393, %v480
        %v482 = vlaneseq
        %v483 = vshrl.u32 %v482, 7
        %v484 = vsub.s32 1, %v483
        %v485 = vrot.slane %v393, %v484
        %v486 = vlaneseq
        %v487 = vshrl.u32 %v486, 7
        %v488 = vsub.s32 2, %v487
        %v489 = vrot.slane %v393, %v488
        %v490 = vlaneseq
        %v491 = vshrl.u32 %v490, 7
        %v492 = vsub.s32 3, %v491
        %v493 = vrot.slane %v393, %v492
        %v494 = vlaneseq
        %v495 = vshrl.u32 %v494, 7
        %v496 = vsub.s32 0, %v495
        %v497 = vrot.slane %v395, %v496
        %v498 = vlaneseq
        %v499 = vshrl.u32 %v498, 7
        %v500 = vsub.s32 1, %v499
        %v501 = vrot.slane %v395, %v500
        %v502 = vlaneseq
        %v503 = vshrl.u32 %v502, 7
        %v504 = vsub.s32 2, %v503
        %v505 = vrot.slane %v395, %v504
        %v506 = vlaneseq
        %v507 = vshrl.u32 %v506, 7
        %v508 = vsub.s32 3, %v507
        %v509 = vrot.slane %v395, %v508
        %v510 = vlaneseq
        %v511 = vshrl.u32 %v510, 7
        %v512 = vsub.s32 0, %v511
        %v513 = vrot.slane %v397, %v512
        %v514 = vlaneseq
        %v515 = vshrl.u32 %v514, 7
        %v516 = vsub.s32 1, %v515
        %v517 = vrot.slane %v397, %v516
        %v518 = vlaneseq
        %v519 = vshrl.u32 %v518, 7
        %v520 = vsub.s32 2, %v519
        %v521 = vrot.slane %v397, %v520
        %v522 = vlaneseq
        %v523 = vshrl.u32 %v522, 7
        %v524 = vsub.s32 3, %v523
        %v525 = vrot.slane %v397, %v524
        %v558 = vmul.f32 %v401, %v322
        %v559 = vmul.f32 %v405, %v323
        %v560 = vmul.f32 %v409, %v324
        %v561 = vmul.f32 %v413, %v325
        %v562 = vmul.f32 %v417, %v322
        %v563 = vmul.f32 %v421, %v323
        %v564 = vmul.f32 %v425, %v324
        %v565 = vmul.f32 %v429, %v325
        %v566 = vmul.f32 %v433, %v322
        %v567 = vmul.f32 %v437, %v323
        %v568 = vmul.f32 %v441, %v324
        %v569 = vmul.f32 %v445, %v325
        %v570 = vmul.f32 %v449, %v322
        %v571 = vmul.f32 %v453, %v323
        %v572 = vmul.f32 %v457, %v324
        %v573 = vmul.f32 %v461, %v325
        %v574 = vmul.f32 %v465, %v322
        %v575 = vmul.f32 %v469, %v323
        %v576 = vmul.f32 %v473, %v324
        %v577 = vmul.f32 %v477, %v325
        %v578 = vmul.f32 %v481, %v322
        %v579 = vmul.f32 %v485, %v323
        %v580 = vmul.f32 %v489, %v324
        %v581 = vmul.f32 %v493, %v325
        %v582 = vmul.f32 %v497, %v322
        %v583 = vmul.f32 %v501, %v323
        %v584 = vmul.f32 %v505, %v324
        %v585 = vmul.f32 %v509, %v325
        %v586 = vmul.f32 %v513, %v322
        %v587 = vmul.f32 %v517, %v323
        %v588 = vmul.f32 %v521, %v324
        %v589 = vmul.f32 %v525, %v325
        %v590 = vld [vmem:[#allocation5] sm:$0xff]
        %v591 = vld [vmem:[#allocation5 + $0x8] sm:$0xff]
        %v592 = vld [vmem:[#allocation5 + $0x10] sm:$0xff]
        %v593 = vld [vmem:[#allocation5 + $0x18] sm:$0xff]
        %vm594 = vcmask 523264
        %v596 = vsel %vm594, %v590, 0
        %v599 = vsel %vm594, %v591, 0
        %v602 = vsel %vm594, %v592, 0
        %v605 = vsel %vm594, %v593, 0
        %607 = vmatprep.subr.mxu0 %v559
        %608 = vmatpush1.msra.mxu0 %v558
        %609 = vmatprep.subr.mxu0 %v563
        %610 = vmatpush1.msra.mxu0 %v562
        %611 = vmatprep.subr.mxu0 %v567
        %612 = vmatpush1.msra.mxu0 %v566
        %613 = vmatprep.subr.mxu0 %v571
        %614 = vmatpush1.msra.mxu0 %v570
        %615 = vmatprep.subr.mxu0 %v575
        %616 = vmatpush1.msra.mxu0 %v574
        %617 = vmatprep.subr.mxu0 %v579
        %618 = vmatpush1.msra.mxu0 %v578
        %619 = vmatprep.subr.mxu0 %v583
        %620 = vmatpush1.msra.mxu0 %v582
        %621 = vmatprep.subr.mxu0 %v587
        %622 = vmatpush1.msra.mxu0 %v586
        %623 = vmatprep.subr.mxu0 0.0
        %624 = vmatpush1.msra.mxu0 0.0
        %625 = vmatprep.subr.mxu0 0.0
        %626 = vmatpush1.msra.mxu0 0.0
        %627 = vmatprep.subr.mxu0 0.0
        %628 = vmatpush1.msra.mxu0 0.0
        %629 = vmatprep.subr.mxu0 0.0
        %630 = vmatpush1.msra.mxu0 0.0
        %631 = vmatprep.subr.mxu0 0.0
        %632 = vmatpush1.msra.mxu0 0.0
        %633 = vmatprep.subr.mxu0 0.0
        %634 = vmatpush1.msra.mxu0 0.0
        %635 = vmatprep.subr.mxu0 0.0
        %636 = vmatpush1.msra.mxu0 0.0
        %637 = vmatprep.subr.mxu0 0.0
        %638 = vmatpush1.msra.mxu0 0.0
        %639 = vmatprep.subr.mxu0 0.0
        %640 = vmatpush1.msra.mxu0 0.0
        %641 = vmatprep.subr.mxu0 0.0
        %642 = vmatpush1.msra.mxu0 0.0
        %643 = vmatprep.subr.mxu0 0.0
        %644 = vmatpush1.msra.mxu0 0.0
        %645 = vmatprep.subr.mxu0 0.0
        %646 = vmatpush1.msra.mxu0 0.0
        %647 = vmatprep.subr.mxu0 0.0
        %648 = vmatpush1.msra.mxu0 0.0
        %649 = vmatprep.subr.mxu0 0.0
        %650 = vmatpush1.msra.mxu0 0.0
        %651 = vmatprep.subr.mxu0 0.0
        %652 = vmatpush1.msra.mxu0 0.0
        %653 = vmatprep.subr.mxu0 0.0
        %654 = vmatpush1.msra.mxu0 0.0
        %655 = vmatprep.subr.mxu0 0.0
        %656 = vmatpush1.msra.mxu0 0.0
        %657 = vmatprep.subr.mxu0 0.0
        %658 = vmatpush1.msra.mxu0 0.0
        %659 = vmatprep.subr.mxu0 0.0
        %660 = vmatpush1.msra.mxu0 0.0
        %661 = vmatprep.subr.mxu0 0.0
        %662 = vmatpush1.msra.mxu0 0.0
        %663 = vmatprep.subr.mxu0 0.0
        %664 = vmatpush1.msra.mxu0 0.0
        %665 = vmatprep.subr.mxu0 0.0
        %666 = vmatpush1.msra.mxu0 0.0
        %667 = vmatprep.subr.mxu0 0.0
        %668 = vmatpush1.msra.mxu0 0.0
        %669 = vmatprep.subr.mxu0 0.0
        %670 = vmatpush1.msra.mxu0 0.0
        %671 = vmatprep.mubr.f32.mxu0 0.0
        %672 = vmatmul.mubr.f32.gmra.mrb[0].mxu0 %v596
        %v673 = vpop.f32.mrb[0].mxu0
        %v674 = vadd.f32 0.0, %v673
        %v675 = vpop.f32.mrb[0].mxu0
        %v676 = vadd.f32 0.0, %v675
        %677 = vmatprep.mubr.f32.mxu0 0.0
        %678 = vmatmul.mubr.f32.gmra.mrb[0].mxu0 %v599
        %v679 = vpop.f32.mrb[0].mxu0
        %v680 = vadd.f32 0.0, %v679
        %v681 = vpop.f32.mrb[0].mxu0
        %v682 = vadd.f32 0.0, %v681
        %683 = vmatprep.mubr.f32.mxu0 0.0
        %684 = vmatmul.mubr.f32.gmra.mrb[0].mxu0 %v602
        %v685 = vpop.f32.mrb[0].mxu0
        %v686 = vadd.f32 0.0, %v685
        %v687 = vpop.f32.mrb[0].mxu0
        %v688 = vadd.f32 0.0, %v687
        %689 = vmatprep.mubr.f32.mxu0 0.0
        %690 = vmatmul.mubr.f32.gmra.mrb[0].mxu0 %v605
        %v691 = vpop.f32.mrb[0].mxu0
        %v692 = vadd.f32 0.0, %v691
        %v693 = vpop.f32.mrb[0].mxu0
        %v694 = vadd.f32 0.0, %v693
        %695 = vdwg.mxu0
        %696 = vmatprep.subr.mxu0 %v561
        %697 = vmatpush1.msra.mxu0 %v560
        %698 = vmatprep.subr.mxu0 %v565
        %699 = vmatpush1.msra.mxu0 %v564
        %700 = vmatprep.subr.mxu0 %v569
        %701 = vmatpush1.msra.mxu0 %v568
        %702 = vmatprep.subr.mxu0 %v573
        %703 = vmatpush1.msra.mxu0 %v572
        %704 = vmatprep.subr.mxu0 %v577
        %705 = vmatpush1.msra.mxu0 %v576
        %706 = vmatprep.subr.mxu0 %v581
        %707 = vmatpush1.msra.mxu0 %v580
        %708 = vmatprep.subr.mxu0 %v585
        %709 = vmatpush1.msra.mxu0 %v584
        %710 = vmatprep.subr.mxu0 %v589
        %711 = vmatpush1.msra.mxu0 %v588
        %712 = vmatprep.subr.mxu0 0.0
        %713 = vmatpush1.msra.mxu0 0.0
        %714 = vmatprep.subr.mxu0 0.0
        %715 = vmatpush1.msra.mxu0 0.0
        %716 = vmatprep.subr.mxu0 0.0
        %717 = vmatpush1.msra.mxu0 0.0
        %718 = vmatprep.subr.mxu0 0.0
        %719 = vmatpush1.msra.mxu0 0.0
        %720 = vmatprep.subr.mxu0 0.0
        %721 = vmatpush1.msra.mxu0 0.0
        %722 = vmatprep.subr.mxu0 0.0
        %723 = vmatpush1.msra.mxu0 0.0
        %724 = vmatprep.subr.mxu0 0.0
        %725 = vmatpush1.msra.mxu0 0.0
        %726 = vmatprep.subr.mxu0 0.0
        %727 = vmatpush1.msra.mxu0 0.0
        %728 = vmatprep.subr.mxu0 0.0
        %729 = vmatpush1.msra.mxu0 0.0
        %730 = vmatprep.subr.mxu0 0.0
        %731 = vmatpush1.msra.mxu0 0.0
        %732 = vmatprep.subr.mxu0 0.0
        %733 = vmatpush1.msra.mxu0 0.0
        %734 = vmatprep.subr.mxu0 0.0
        %735 = vmatpush1.msra.mxu0 0.0
        %736 = vmatprep.subr.mxu0 0.0
        %737 = vmatpush1.msra.mxu0 0.0
        %738 = vmatprep.subr.mxu0 0.0
        %739 = vmatpush1.msra.mxu0 0.0
        %740 = vmatprep.subr.mxu0 0.0
        %741 = vmatpush1.msra.mxu0 0.0
        %742 = vmatprep.subr.mxu0 0.0
        %743 = vmatpush1.msra.mxu0 0.0
        %744 = vmatprep.subr.mxu0 0.0
        %745 = vmatpush1.msra.mxu0 0.0
        %746 = vmatprep.subr.mxu0 0.0
        %747 = vmatpush1.msra.mxu0 0.0
        %748 = vmatprep.subr.mxu0 0.0
        %749 = vmatpush1.msra.mxu0 0.0
        %750 = vmatprep.subr.mxu0 0.0
        %751 = vmatpush1.msra.mxu0 0.0
        %752 = vmatprep.subr.mxu0 0.0
        %753 = vmatpush1.msra.mxu0 0.0
        %754 = vmatprep.subr.mxu0 0.0
        %755 = vmatpush1.msra.mxu0 0.0
        %756 = vmatprep.subr.mxu0 0.0
        %757 = vmatpush1.msra.mxu0 0.0
        %758 = vmatprep.subr.mxu0 0.0
        %759 = vmatpush1.msra.mxu0 0.0
        %760 = vmatprep.mubr.f32.mxu0 0.0
        %761 = vmatmul.mubr.f32.gmra.mrb[0].mxu0 %v596
        %v762 = vpop.f32.mrb[0].mxu0
        %v763 = vadd.f32 0.0, %v762
        %v764 = vpop.f32.mrb[0].mxu0
        %v765 = vadd.f32 0.0, %v764
        %766 = vmatprep.mubr.f32.mxu0 0.0
        %767 = vmatmul.mubr.f32.gmra.mrb[0].mxu0 %v599
        %v768 = vpop.f32.mrb[0].mxu0
        %v769 = vadd.f32 0.0, %v768
        %v770 = vpop.f32.mrb[0].mxu0
        %v771 = vadd.f32 0.0, %v770
        %772 = vmatprep.mubr.f32.mxu0 0.0
        %773 = vmatmul.mubr.f32.gmra.mrb[0].mxu0 %v602
        %v774 = vpop.f32.mrb[0].mxu0
        %v775 = vadd.f32 0.0, %v774
        %v776 = vpop.f32.mrb[0].mxu0
        %v777 = vadd.f32 0.0, %v776
        %778 = vmatprep.mubr.f32.mxu0 0.0
        %779 = vmatmul.mubr.f32.gmra.mrb[0].mxu0 %v605
        %v780 = vpop.f32.mrb[0].mxu0
        %v781 = vadd.f32 0.0, %v780
        %v782 = vpop.f32.mrb[0].mxu0
        %v783 = vadd.f32 0.0, %v782
        %784 = vdwg.mxu0
        %v785 = vmul.f32 %v674, %v248
        %v786 = vmul.f32 %v676, %v249
        %v787 = vmul.f32 %v763, %v250
        %v788 = vmul.f32 %v765, %v251
        %v789 = vrot.slane %v785, 4
        %v790 = vadd.f32 %v785, %v789
        %v791 = vrot.slane %v790, 2
        %v792 = vadd.f32 %v790, %v791
        %v793 = vrot.slane %v792, 1
        %v794 = vadd.f32 %v792, %v793
        %v795 = vrot.slane %v786, 4
        %v796 = vadd.f32 %v786, %v795
        %v797 = vrot.slane %v796, 2
        %v798 = vadd.f32 %v796, %v797
        %v799 = vrot.slane %v798, 1
        %v800 = vadd.f32 %v798, %v799
        %v801 = vrot.slane %v787, 4
        %v802 = vadd.f32 %v787, %v801
        %v803 = vrot.slane %v802, 2
        %v804 = vadd.f32 %v802, %v803
        %v805 = vrot.slane %v804, 1
        %v806 = vadd.f32 %v804, %v805
        %v807 = vrot.slane %v788, 4
        %v808 = vadd.f32 %v788, %v807
        %v809 = vrot.slane %v808, 2
        %v810 = vadd.f32 %v808, %v809
        %v811 = vrot.slane %v810, 1
        %v812 = vadd.f32 %v810, %v811
        %v813 = vmul.f32 %v680, %v248
        %v814 = vmul.f32 %v682, %v249
        %v815 = vmul.f32 %v769, %v250
        %v816 = vmul.f32 %v771, %v251
        %v817 = vrot.slane %v813, 4
        %v818 = vadd.f32 %v813, %v817
        %v819 = vrot.slane %v818, 2
        %v820 = vadd.f32 %v818, %v819
        %v821 = vrot.slane %v820, 1
        %v822 = vadd.f32 %v820, %v821
        %v823 = vrot.slane %v814, 4
        %v824 = vadd.f32 %v814, %v823
        %v825 = vrot.slane %v824, 2
        %v826 = vadd.f32 %v824, %v825
        %v827 = vrot.slane %v826, 1
        %v828 = vadd.f32 %v826, %v827
        %v829 = vrot.slane %v815, 4
        %v830 = vadd.f32 %v815, %v829
        %v831 = vrot.slane %v830, 2
        %v832 = vadd.f32 %v830, %v831
        %v833 = vrot.slane %v832, 1
        %v834 = vadd.f32 %v832, %v833
        %v835 = vrot.slane %v816, 4
        %v836 = vadd.f32 %v816, %v835
        %v837 = vrot.slane %v836, 2
        %v838 = vadd.f32 %v836, %v837
        %v839 = vrot.slane %v838, 1
        %v840 = vadd.f32 %v838, %v839
        %v841 = vmul.f32 %v686, %v248
        %v842 = vmul.f32 %v688, %v249
        %v843 = vmul.f32 %v775, %v250
        %v844 = vmul.f32 %v777, %v251
        %v845 = vrot.slane %v841, 4
        %v846 = vadd.f32 %v841, %v845
        %v847 = vrot.slane %v846, 2
        %v848 = vadd.f32 %v846, %v847
        %v849 = vrot.slane %v848, 1
        %v850 = vadd.f32 %v848, %v849
        %v851 = vrot.slane %v842, 4
        %v852 = vadd.f32 %v842, %v851
        %v853 = vrot.slane %v852, 2
        %v854 = vadd.f32 %v852, %v853
        %v855 = vrot.slane %v854, 1
        %v856 = vadd.f32 %v854, %v855
        %v857 = vrot.slane %v843, 4
        %v858 = vadd.f32 %v843, %v857
        %v859 = vrot.slane %v858, 2
        %v860 = vadd.f32 %v858, %v859
        %v861 = vrot.slane %v860, 1
        %v862 = vadd.f32 %v860, %v861
        %v863 = vrot.slane %v844, 4
        %v864 = vadd.f32 %v844, %v863
        %v865 = vrot.slane %v864, 2
        %v866 = vadd.f32 %v864, %v865
        %v867 = vrot.slane %v866, 1
        %v868 = vadd.f32 %v866, %v867
        %v869 = vmul.f32 %v692, %v248
        %v870 = vmul.f32 %v694, %v249
        %v871 = vmul.f32 %v781, %v250
        %v872 = vmul.f32 %v783, %v251
        %v873 = vrot.slane %v869, 4
        %v874 = vadd.f32 %v869, %v873
        %v875 = vrot.slane %v874, 2
        %v876 = vadd.f32 %v874, %v875
        %v877 = vrot.slane %v876, 1
        %v878 = vadd.f32 %v876, %v877
        %v879 = vrot.slane %v870, 4
        %v880 = vadd.f32 %v870, %v879
        %v881 = vrot.slane %v880, 2
        %v882 = vadd.f32 %v880, %v881
        %v883 = vrot.slane %v882, 1
        %v884 = vadd.f32 %v882, %v883
        %v885 = vrot.slane %v871, 4
        %v886 = vadd.f32 %v871, %v885
        %v887 = vrot.slane %v886, 2
        %v888 = vadd.f32 %v886, %v887
        %v889 = vrot.slane %v888, 1
        %v890 = vadd.f32 %v888, %v889
        %v891 = vrot.slane %v872, 4
        %v892 = vadd.f32 %v872, %v891
        %v893 = vrot.slane %v892, 2
        %v894 = vadd.f32 %v892, %v893
        %v895 = vrot.slane %v894, 1
        %v896 = vadd.f32 %v894, %v895
        %vm897 = vcmask 1040384
        %v898 = vsel %vm897, %v794, %v822
        %v899 = vsel %vm897, %v800, %v828
        %v900 = vsel %vm897, %v806, %v834
        %v901 = vsel %vm897, %v812, %v840
        %vm902 = vcmask 1041408
        %v903 = vsel %vm902, %v898, %v850
        %v904 = vsel %vm902, %v899, %v856
        %v905 = vsel %vm902, %v900, %v862
        %v906 = vsel %vm902, %v901, %v868
        %vm907 = vcmask 1042432
        %v908 = vsel %vm907, %v903, %v878
        %v909 = vsel %vm907, %v904, %v884
        %v910 = vsel %vm907, %v905, %v890
        %v911 = vsel %vm907, %v906, %v896
        %v916 = vcombine.low %v908, %v909
        %v917 = vcombine.low %v910, %v911
        %920 = vst [vmem:[%s201] sm:$0xff] %v916
        %921 = vst [vmem:[%s201 + $0x8] sm:$0xff] %v917
        %s922 = sand.u32 %s97, 1
        %s923 = scalar_lea.sflag [#allocation4], %s922
        %s924 = sand.u32 %s97, 1
        %s925 = smul.addr %s924, 16
        %s926 = scalar_lea.vmem [#allocation7], %s925
        // Predicated region
        $region41: #{tpu_custom_call.1} parent=31 // pred_check
          %p927 = pneg %p107
        $region42: #{tpu_custom_call.1} parent=31 // pred_check_branch
          %929 = sbr.rel (%p927) target = $region44
        $region43: #{tpu_custom_call.1} parent=31 // pred_region
          %s930 = smul.u32 4, %s21
          %s932 = ssub.s32 256, 256
          %933 = vsyncadd %s923, %s932
          %s934 = smul.addr %s930, 64
          %s935 = scalar_lea.hbm %s3, %s934
          %s937 = sshll.u32 %s926, 4
          %s938 = int_to_ptr.vmem [resolvable:$true] %s937
          %940 = dma.vmem_to_hbm [thread:$0]  %s938, 256, %s935, %s923
        $region44: #{tpu_custom_call.1} parent=31 // pred_fallthru
          _
      $region32: #{tpu_custom_call.1} parent=5 // pred_fallthru
        _
      %p941 = scmp.le.s32.totalorder 2, %s16
      // Predicated region
      $region45: #{tpu_custom_call.1} parent=5 // pred_check
        %p942 = pneg %p941
      $region46: #{tpu_custom_call.1} parent=5 // pred_check_branch
        %944 = sbr.rel (%p942) target = $region48
      $region47: #{tpu_custom_call.1} parent=5 // pred_region
        %s945 = ssub.s32 %s16, 2
        // Predicated region
        $region49: #{tpu_custom_call.1} parent=47 // pred_check
          %p946 = pneg %p113
        $region50: #{tpu_custom_call.1} parent=47 // pred_check_branch
          %948 = sbr.rel (%p946) target = $region52
        $region51: #{tpu_custom_call.1} parent=47 // pred_region
          %s949 = sand.u32 %s98, 1
          %s950 = scalar_lea.sflag [#allocation4], %s949
          %s951 = sand.u32 %s98, 1
          %s952 = smul.addr %s951, 16
          %s953 = scalar_lea.vmem [#allocation7], %s952
          %954 = dma.done %s950, 256
        $region52: #{tpu_custom_call.1} parent=47 // pred_fallthru
          _
      $region48: #{tpu_custom_call.1} parent=5 // pred_fallthru
        _
    $region6: #{tpu_custom_call.1} parent=1 // loop_footer
      %s20 = sadd.s32 1, %s16
    $region7: #{tpu_custom_call.1} parent=1 // loop_footer_branch
      %15 = sbr.rel target = $region3
    $region8: #{tpu_custom_call.1} parent=1 // loop_exit
      _
    %955 = vsyncpa [#allocation3], 1
    %s956 = scalar_lea.sflag [#allocation3], 1
    %957 = vsyncpa %s956, 1
    %958 = vsyncpa [#allocation6], 1
    %959 = vsyncpa [#allocation4], 1
    %s960 = scalar_lea.sflag [#allocation4], 1
    %961 = vsyncpa %s960, 1

</llo_original>
